<compile_context>
chip_gen: v7x
topology: tpu7x:2x2x1
jax: 0.10.0
libtpu: 0.0.40
codegen_flags: <defaults>
</compile_context>

<pallas_src>
import jax
import jax.numpy as jnp
from jax.experimental import pallas as pl
from jax.experimental.pallas import tpu as pltpu

LANE = 128
SUBLANE = 8


def _linear12_kernel(params_ref, x_ref, o_ref):
    # params_ref: SMEM (4,) f32 = [w0, w1, b0, b1]
    # x_ref:      VMEM (TILE_R, 128)      -- batch on lanes, any float dtype
    # o_ref:      VMEM (2, TILE_R, 128) f32 -- one full-lane slab per logit
    x = x_ref[...].astype(jnp.float32)
    w0 = params_ref[0]
    w1 = params_ref[1]
    b0 = params_ref[2]
    b1 = params_ref[3]
    o_ref[0, :, :] = x * w0 + b0
    o_ref[1, :, :] = x * w1 + b1


def _round_up(v, m):
    return ((v + m - 1) // m) * m


def _pick_tile_rows(rows):
    """Per-generation default tile size (rows of 128 lanes each)."""
    try:
        kind = jax.devices()[0].device_kind.lower()
    except Exception:  # pragma: no cover - defensive
        kind = ""
    if "v7" in kind:
        # ~3.2 TB/s HBM: need big tiles; also want >=2 tiles for 2 TCs.
        cap, min_tiles = 4096, 2          # ~12 MiB double-buffered, < 32 MiB
    else:
        # v5e (16 MiB scoped default) and v6e: 2048 rows = ~6 MiB dbl-buffered.
        cap, min_tiles = 2048, 1
    tile = min(cap, rows)
    if min_tiles > 1 and rows >= min_tiles * SUBLANE:
        tile = min(tile, _round_up(pl.cdiv(rows, min_tiles), SUBLANE))
    return max(SUBLANE, _round_up(tile, SUBLANE))


def perplexity_classifier(x, weight, bias, *, tile_rows=None,
                          planar_output=False):
    """Linear(1, 2): x (B, 1) -> (B, 2) float32.

    If planar_output=True, returns the (2, B) planar layout instead,
    skipping the final relayout for consumers that can take it.
    """
    B = x.shape[0]
    if B == 0:
        return (jnp.zeros((2, 0), jnp.float32) if planar_output
                else jnp.zeros((0, 2), jnp.float32))

    xf = x.reshape(-1)                                   # keep caller dtype
    # Lane-dense layout: batch on the 128-lane axis, rows on sublanes.
    rows = max(SUBLANE, _round_up(pl.cdiv(B, LANE), SUBLANE))
    padded = rows * LANE
    if padded != B:
        xf = jnp.pad(xf, (0, padded - B))                # tail-pad only
    x2d = xf.reshape(rows, LANE)

    if tile_rows is None:
        tile_rows = _pick_tile_rows(rows)
    tile_rows = max(SUBLANE, _round_up(min(int(tile_rows), rows), SUBLANE))
    num_tiles = pl.cdiv(rows, tile_rows)                 # ragged last block OK

    # 4 scalars for SMEM: [w0, w1, b0, b1]
    params = jnp.concatenate(
        [weight.reshape(-1).astype(jnp.float32),
         bias.reshape(-1).astype(jnp.float32)])

    out = pl.pallas_call(
        _linear12_kernel,
        out_shape=jax.ShapeDtypeStruct((2, rows, LANE), jnp.float32),
        grid=(num_tiles,),
        in_specs=[
            pl.BlockSpec(memory_space=pltpu.MemorySpace.SMEM),   # params
            pl.BlockSpec((tile_rows, LANE), lambda i: (i, 0)),   # x tile
        ],
        out_specs=pl.BlockSpec((2, tile_rows, LANE), lambda i: (0, i, 0)),
        compiler_params=pltpu.CompilerParams(
            dimension_semantics=("parallel",),
        ),
    )(params, x2d)

    planar = out.reshape(2, padded)[:, :B]               # (2, B)
    if planar_output:
        return planar
    # TODO(synk): for very large B an in-kernel lane interleave of the two
    # logits (emit (tile_rows, 256)) would turn this relayout into a
    # contiguous reshape; kept planar here for lowering safety.
    return planar.T                                      # (B, 2)


if __name__ == "__main__":
    key = jax.random.PRNGKey(0)
    kx, kw, kb = jax.random.split(key, 3)

    # Deterministic init mimicking nn.Linear(1, 2):
    # uniform(-1/sqrt(in_features), 1/sqrt(in_features)), in_features = 1.
    bound = 1.0
    weight = jax.random.uniform(kw, (2, 1), minval=-bound, maxval=bound,
                                dtype=jnp.float32)
    bias = jax.random.uniform(kb, (2,), minval=-bound, maxval=bound,
                              dtype=jnp.float32)

    # 1) Realistic small batch: single (8, 128) block, grid=(1,).
    B = 8
    x = jax.random.normal(kx, (B, 1), dtype=jnp.float32)
    out = jax.block_until_ready(perplexity_classifier(x, weight, bias))
    ref = x @ weight.T + bias
    assert out.shape == (B, 2)
    assert jnp.allclose(out, ref, atol=1e-6), "mismatch vs reference (B=8)"

    # 2) Multi-tile + ragged last block + tail padding (correctness-only
    #    tiling; defaults are used for real workloads).
    B2 = 3000                      # rows = 24, tile_rows = 16 -> blocks 16 + 8
    x2 = jax.random.normal(kx, (B2, 1), dtype=jnp.float32)
    out2 = jax.block_until_ready(
        perplexity_classifier(x2, weight, bias, tile_rows=16))
    ref2 = x2 @ weight.T + bias
    assert out2.shape == (B2, 2)
    assert jnp.allclose(out2, ref2, atol=1e-6), "mismatch vs reference (B=3000)"

    # 3) bf16 input path (cast happens inside the kernel).
    x3 = x2.astype(jnp.bfloat16)
    out3 = jax.block_until_ready(perplexity_classifier(x3, weight, bias))
    ref3 = x3.astype(jnp.float32) @ weight.T + bias
    assert out3.shape == (B2, 2)
    assert jnp.allclose(out3, ref3, atol=1e-2), "mismatch vs reference (bf16)"

    # 4) Planar (2, B) consumer path (no transpose).
    outp = jax.block_until_ready(
        perplexity_classifier(x2, weight, bias, planar_output=True))
    assert outp.shape == (2, B2)
    assert jnp.allclose(outp.T, ref2, atol=1e-6), "mismatch vs reference (planar)"

    print("KERNEL_OK")
</pallas_src>

<mosaic_0001>
module attributes {stable_mosaic.version = 11 : i64} {
  func.func @_linear12_kernel(%arg0: i32, %arg1: memref<4xf32, #tpu.memory_space<smem>>, %arg2: memref<8x128xf32, #tpu.memory_space<vmem>>, %arg3: memref<2x8x128xf32, #tpu.memory_space<vmem>>) attributes {dimension_semantics = [#tpu.dimension_semantics<parallel>], iteration_bounds = array<i64: 1>, scalar_prefetch = 0 : i64, scratch_operands = 0 : i64, tpu.core_type = #tpu.core_type<tc>, window_params = [{transform_indices = @transform_0, window_bounds = array<i64: 4>}, {transform_indices = @transform_1, window_bounds = array<i64: 8, 128>}, {transform_indices = @transform_2, window_bounds = array<i64: 2, 8, 128>}]} {
    %c0 = arith.constant 0 : index
    %c0_0 = arith.constant 0 : index
    %0 = vector.load %arg2[%c0, %c0_0] : memref<8x128xf32, #tpu.memory_space<vmem>>, vector<8x128xf32>
    %c0_1 = arith.constant 0 : index
    %1 = memref.load %arg1[%c0_1] : memref<4xf32, #tpu.memory_space<smem>>
    %c1 = arith.constant 1 : index
    %2 = memref.load %arg1[%c1] : memref<4xf32, #tpu.memory_space<smem>>
    %c2 = arith.constant 2 : index
    %3 = memref.load %arg1[%c2] : memref<4xf32, #tpu.memory_space<smem>>
    %c3 = arith.constant 3 : index
    %4 = memref.load %arg1[%c3] : memref<4xf32, #tpu.memory_space<smem>>
    %5 = vector.broadcast %1 : f32 to vector<8x128xf32>
    %6 = arith.mulf %0, %5 : vector<8x128xf32>
    %7 = vector.broadcast %3 : f32 to vector<8x128xf32>
    %8 = arith.addf %6, %7 : vector<8x128xf32>
    %c0_2 = arith.constant 0 : index
    %c0_3 = arith.constant 0 : index
    %c0_4 = arith.constant 0 : index
    %9 = vector.load %arg3[%c0_2, %c0_3, %c0_4] : memref<2x8x128xf32, #tpu.memory_space<vmem>>, vector<1x8x128xf32>
    %10 = vector.shape_cast %9 : vector<1x8x128xf32> to vector<8x128xf32>
    %11 = vector.shape_cast %8 : vector<8x128xf32> to vector<1x8x128xf32>
    tpu.vector_store %arg3[%c0_2, %c0_3, %c0_4], %11 {strides = array<i32>} : memref<2x8x128xf32, #tpu.memory_space<vmem>>, vector<1x8x128xf32>,
    %12 = vector.broadcast %2 : f32 to vector<8x128xf32>
    %13 = arith.mulf %0, %12 : vector<8x128xf32>
    %14 = vector.broadcast %4 : f32 to vector<8x128xf32>
    %15 = arith.addf %13, %14 : vector<8x128xf32>
    %c1_5 = arith.constant 1 : index
    %c0_6 = arith.constant 0 : index
    %c0_7 = arith.constant 0 : index
    %16 = vector.load %arg3[%c1_5, %c0_6, %c0_7] : memref<2x8x128xf32, #tpu.memory_space<vmem>>, vector<1x8x128xf32>
    %17 = vector.shape_cast %16 : vector<1x8x128xf32> to vector<8x128xf32>
    %18 = vector.shape_cast %15 : vector<8x128xf32> to vector<1x8x128xf32>
    tpu.vector_store %arg3[%c1_5, %c0_6, %c0_7], %18 {strides = array<i32>} : memref<2x8x128xf32, #tpu.memory_space<vmem>>, vector<1x8x128xf32>,
    return
  }
  func.func @transform_0(%arg0: i32) -> i32 {
    %c0_i32 = arith.constant 0 : i32
    %c0_i32_0 = arith.constant 0 : i32
    return %c0_i32 : i32
  }
  func.func @transform_1(%arg0: i32) -> (i32, i32) {
    %c0_i32 = arith.constant 0 : i32
    %c0_i32_0 = arith.constant 0 : i32
    return %arg0, %c0_i32 : i32, i32
  }
  func.func @transform_2(%arg0: i32) -> (i32, i32, i32) {
    %c0_i32 = arith.constant 0 : i32
    %c0_i32_0 = arith.constant 0 : i32
    %c0_i32_1 = arith.constant 0 : i32
    return %c0_i32, %arg0, %c0_i32_0 : i32, i32, i32
  }
}

</mosaic_0001>

<llo_original>
// kernel: tpu_custom_call.1
$region0: #{tpu_custom_call.1}
  #allocation0 [shape = 'u32[]', space=smem, size = 0x4, offset = 0x4, fixed_abs, tag = 'smem constant byte address 0x4 - core index']
  #allocation1 [shape = 'u32[144,128]{1,0:T(1,128)}', space=vmem, size = 0x12000, scoped, tag = 'internal scratch']
  %s0 = inlined_call_operand.hbm [shape: f32[4], index: 0, kind: input, shape index: {}]
  %s1 = inlined_call_operand.hbm [shape: f32[8,128], index: 1, kind: input, shape index: {}]
  %s2 = inlined_call_operand.hbm [shape: f32[2,8,128], index: 2, kind: output, shape index: {}]
  %s3 = sld [smem:[#allocation0]]
  $region26: #{tpu_custom_call.1} parent=0
    _
  %s5 = ssub.s32 1, %s3
  %s6 = scalar_select 0, %s5, %s3
  $region1: #{tpu_custom_call.1} parent=0
    #allocation2 [shape = 'u8[512]{0}', space=smem, size = 0x200, scoped, tag = 'input window, operand 0, single buffered']
    #allocation3 [shape = 's32[1]{0}', space=sflag, size = 0x4, scoped, tag = 'scoped memory for tpu_custom_call.1']
    #allocation4 [shape = 's32[1]{0}', space=sflag, size = 0x4, scoped, tag = 'scoped memory for tpu_custom_call.1']
    #allocation5 [shape = 's32[1]{0}', space=sflag, size = 0x4, scoped, tag = 'scoped memory for tpu_custom_call.1']
    #allocation6 [shape = 'u8[4096]{0}', space=vmem, size = 0x1000, scoped, tag = 'input window, operand 1, single buffered']
    #allocation7 [shape = 'u8[8192]{0}', space=vmem, size = 0x2000, scoped, tag = 'output window, operand 0, single buffered']
    %7 = vsyncpa [#allocation5], 0
    %8 = vsyncpa [#allocation3], 0
    %9 = vsyncpa [#allocation4], 0
    // Predicated region
    $region2: #{tpu_custom_call.1} parent=1 // pred_check
      _
    $region3: #{tpu_custom_call.1} parent=1 // pred_check_branch
      %11 = sbr.rel (0) target = $region5
    $region4: #{tpu_custom_call.1} parent=1 // pred_region
      %s13 = ssub.s32 16, 16
      %14 = vsyncadd [#allocation5], %s13
      %17 = dma.hbm_to_smem %s0, 16, [#allocation2], [#allocation5]
    $region5: #{tpu_custom_call.1} parent=1 // pred_fallthru
      _
    // Predicated region
    $region6: #{tpu_custom_call.1} parent=1 // pred_check
      _
    $region7: #{tpu_custom_call.1} parent=1 // pred_check_branch
      %19 = sbr.rel (0) target = $region9
    $region8: #{tpu_custom_call.1} parent=1 // pred_region
      %s21 = ssub.s32 128, 128
      %22 = vsyncadd [#allocation3], %s21
      %s24 = sshll.u32 [#allocation6], 4
      %s25 = int_to_ptr.vmem [resolvable:$true] %s24
      %27 = dma.hbm_to_vmem [thread:$0]  %s1, 128, %s25, [#allocation3]
    $region9: #{tpu_custom_call.1} parent=1 // pred_fallthru
      _
    // Predicated region
    $region10: #{tpu_custom_call.1} parent=1 // pred_check
      _
    $region11: #{tpu_custom_call.1} parent=1 // pred_check_branch
      %29 = sbr.rel (0) target = $region13
    $region12: #{tpu_custom_call.1} parent=1 // pred_region
      %30 = dma.done [#allocation5], 16
    $region13: #{tpu_custom_call.1} parent=1 // pred_fallthru
      _
    // Predicated region
    $region14: #{tpu_custom_call.1} parent=1 // pred_check
      _
    $region15: #{tpu_custom_call.1} parent=1 // pred_check_branch
      %32 = sbr.rel (0) target = $region17
    $region16: #{tpu_custom_call.1} parent=1 // pred_region
      %33 = dma.done [#allocation3], 128
    $region17: #{tpu_custom_call.1} parent=1 // pred_fallthru
      _
    %34 = sfence
    %v35 = vld [vmem:[#allocation6] sm:$0xff]
    %s36 = sld [smem:[#allocation2]]
    %s37 = sld [smem:[#allocation2 + $0x1]]
    %s38 = sld [smem:[#allocation2 + $0x2]]
    %s39 = sld [smem:[#allocation2 + $0x3]]
    %v40 = vstv %s36
    %v41 = vmul.f32 %v35, %v40
    %v42 = vstv %s38
    %v43 = vadd.f32 %v41, %v42
    %44 = vst [vmem:[#allocation7] sm:$0xff] %v43
    %v45 = vstv %s37
    %v46 = vmul.f32 %v35, %v45
    %v47 = vstv %s39
    %v48 = vadd.f32 %v46, %v47
    %s49 = scalar_lea.vmem [#allocation7], 8
    %50 = vst [vmem:[%s49] sm:$0xff] %v48
    // Predicated region
    $region18: #{tpu_custom_call.1} parent=1 // pred_check
      _
    $region19: #{tpu_custom_call.1} parent=1 // pred_check_branch
      %52 = sbr.rel (0) target = $region21
    $region20: #{tpu_custom_call.1} parent=1 // pred_region
      %s54 = ssub.s32 256, 256
      %55 = vsyncadd [#allocation4], %s54
      %s56 = sshll.u32 [#allocation7], 4
      %s57 = int_to_ptr.vmem [resolvable:$true] %s56
      %62 = dma.vmem_to_hbm [thread:$0]  %s57, 256, %s2, [#allocation4], 128, 128, 8
    $region21: #{tpu_custom_call.1} parent=1 // pred_fallthru
      _
    // Predicated region
    $region22: #{tpu_custom_call.1} parent=1 // pred_check
      _
    $region23: #{tpu_custom_call.1} parent=1 // pred_check_branch
      %64 = sbr.rel (0) target = $region25
    $region24: #{tpu_custom_call.1} parent=1 // pred_region
      %65 = dma.done [#allocation4], 256
    $region25: #{tpu_custom_call.1} parent=1 // pred_fallthru
      _
    %66 = vsyncpa [#allocation3], 1
    %67 = vsyncpa [#allocation4], 1
    %68 = vsyncpa [#allocation5], 1

</llo_original>
